<compile_context>
chip_gen: v6e
topology: v6e:2x2x1
jax: 0.10.0
libtpu: 0.0.40
codegen_flags: <defaults>
</compile_context>

<pallas_src>
import functools

import jax
import jax.numpy as jnp
from jax.experimental import pallas as pl
from jax.experimental.pallas import tpu as pltpu

ALPHA = 0.25
GAMMA = 2.0

_LANE = 128
_SUBLANE = 8
_CHUNK_ROWS = 128  # rows per in-kernel sub-chunk (bounds vreg live ranges)


def _cdiv(a, b):
    return -(-a // b)


def _round_up(a, b):
    return _cdiv(a, b) * b


def _default_n_outer():
    """2 TensorCores per chip only on v7x; v5e/v6e have a single TC."""
    try:
        kind = jax.devices()[0].device_kind.lower()
    except Exception:
        return 1
    return 2 if ("v7" in kind or "tpu7" in kind) else 1


# --------------------------------------------------------------------------- #
# Kernel: streaming partial sums of per-element BCE and of targets.
# --------------------------------------------------------------------------- #
def _focal_partial_kernel(x_ref, t_ref, out_ref, acc_bce, acc_t, *, n_valid, chunk):
    """Accumulate sum(BCE) and sum(t) for one (eff_tile, 128) block.

    Grid = (n_outer, n_inner): outer may be sharded across TensorCores (v7x),
    inner is the sequential reduction axis.  Partial sums are dumped to
    out_ref on the last inner step.  Elements whose global flat index is
    >= n_valid (ragged tail / zero padding / clamped duplicate blocks)
    contribute exactly zero via an in-kernel mask that is only evaluated on
    boundary blocks (pl.when).
    """
    o = pl.program_id(0)
    i = pl.program_id(1)
    n_inner = pl.num_programs(1)

    eff_tile = x_ref.shape[0]
    n_chunks = eff_tile // chunk          # static; eff_tile % chunk == 0 by construction
    block_elems = eff_tile * _LANE
    chunk_elems = chunk * _LANE

    @pl.when(i == 0)
    def _():
        acc_bce[...] = jnp.zeros_like(acc_bce)
        acc_t[...] = jnp.zeros_like(acc_t)

    blk = o * n_inner + i                 # intended (unclamped) block index
    start_elem = blk * block_elems        # global flat offset of this block

    def bce_of(x, t):
        # Numerically stable binary_cross_entropy_with_logits (per element):
        #   max(x, 0) - x*t + log1p(exp(-|x|))
        return jnp.maximum(x, 0.0) - x * t + jnp.log1p(jnp.exp(-jnp.abs(x)))

    def fold(v):
        # (chunk, 128) -> (8, 128) with pure VPU vreg adds (no cross-lane XLU).
        return jnp.sum(v.reshape(-1, _SUBLANE, _LANE), axis=0)

    def load(c):
        if n_chunks == 1:
            x = x_ref[...]
            t = t_ref[...]
        else:
            r0 = pl.multiple_of(c * chunk, chunk)
            x = x_ref[pl.ds(r0, chunk), :]
            t = t_ref[pl.ds(r0, chunk), :]
        return x.astype(jnp.float32), t.astype(jnp.float32)

    def run(body):
        if n_chunks == 1:
            body(0, 0)
        else:
            jax.lax.fori_loop(0, n_chunks, body, 0)

    fully_valid = (start_elem + block_elems) <= n_valid

    @pl.when(fully_valid)                 # common case: no masking work at all
    def _():
        def body(c, carry):
            x, t = load(c)
            acc_bce[...] += fold(bce_of(x, t))
            acc_t[...] += fold(t)
            return carry
        run(body)

    @pl.when(jnp.logical_not(fully_valid))   # boundary block: mask the ragged tail
    def _():
        row_iota = jax.lax.broadcasted_iota(jnp.int32, (chunk, _LANE), 0)
        col_iota = jax.lax.broadcasted_iota(jnp.int32, (chunk, _LANE), 1)
        local = row_iota * _LANE + col_iota

        def body(c, carry):
            x, t = load(c)
            valid = (start_elem + c * chunk_elems + local) < n_valid
            acc_bce[...] += fold(jnp.where(valid, bce_of(x, t), 0.0))
            acc_t[...] += fold(jnp.where(valid, t, 0.0))
            return carry
        run(body)

    @pl.when(i == n_inner - 1)
    def _():
        out_ref[0, 0] = acc_bce[...]
        out_ref[0, 1] = acc_t[...]


# --------------------------------------------------------------------------- #
# Wrapper
# --------------------------------------------------------------------------- #
def _reference_math(inputs, targets, alpha, gamma):
    """Pure-JAX mirror of the PyTorch forward (small-input fast path)."""
    x = inputs.astype(jnp.float32).reshape(-1)
    t = targets.astype(jnp.float32).reshape(-1)
    bce = jnp.mean(jnp.maximum(x, 0.0) - x * t + jnp.log1p(jnp.exp(-jnp.abs(x))))
    at = jnp.where(t >= 1.0, 1.0 - alpha, alpha)   # == alpha_table.gather(0, t.long())
    pt = jnp.exp(-bce)
    return jnp.mean(at * (1.0 - pt) ** gamma * bce)


def weighted_focal_loss(inputs, targets, alpha=ALPHA, gamma=GAMMA,
                        row_tile=8192, n_outer=None, min_kernel_elems=(1 << 20)):
    """Forward pass of WeightedFocalLoss.

    NOTE: like the PyTorch module, the alpha weighting assumes binary {0,1}
    targets (torch .long() truncation); soft labels are out of spec for the
    kernel path's closed-form mean(alpha_t).
    """
    n_total = int(inputs.size)
    if n_total == 0:
        return jnp.float32(jnp.nan)

    if not jnp.issubdtype(inputs.dtype, jnp.floating):
        inputs = inputs.astype(jnp.float32)
    if not jnp.issubdtype(targets.dtype, jnp.floating):
        targets = targets.astype(jnp.float32)

    # Small-input fast path: launch/grid fixed costs dominate below ~1M elems.
    if n_total < min_kernel_elems:
        return _reference_math(inputs, targets, alpha, gamma)

    x = inputs.reshape(-1)
    t = targets.reshape(-1)

    # Only if the element count is not a multiple of 8*128 do we pad (one copy);
    # padded elements are zeros and are masked out in-kernel (flat idx >= n_total).
    rem = n_total % (_SUBLANE * _LANE)
    if rem:
        pad = _SUBLANE * _LANE - rem
        x = jnp.pad(x, (0, pad))
        t = jnp.pad(t, (0, pad))
    rows = x.size // _LANE                       # multiple of 8

    # Generation-aware outer split: 2 TensorCores only on v7x.
    if n_outer is None:
        n_outer = _default_n_outer()
    n_outer = max(1, min(2, int(n_outer)))
    if rows < 512:                               # too small to split usefully
        n_outer = 1

    per_core = _cdiv(rows, n_outer)
    row_tile = max(256, (int(row_tile) // 256) * 256)
    if per_core >= 256:
        eff_tile = min(row_tile, (per_core // 256) * 256)   # multiple of 256, <= rows
        chunk = _CHUNK_ROWS
    else:
        eff_tile = _round_up(per_core, _SUBLANE)            # == rows (n_outer==1 here)
        chunk = eff_tile
    n_inner = _cdiv(rows, n_outer * eff_tile)
    n_blocks = _cdiv(rows, eff_tile)             # blocks the array actually has

    x2 = x.reshape(rows, _LANE)                  # free reshape (same layout)
    t2 = t.reshape(rows, _LANE)

    kernel = functools.partial(_focal_partial_kernel, n_valid=n_total, chunk=chunk)

    if n_outer * n_inner == n_blocks:
        in_map = lambda o, i: (o * n_inner + i, 0)
    else:
        # Uneven 2-core split: clamp the (at most one) fully-out-of-range block
        # index onto the last real block; its contribution is masked to zero.
        in_map = lambda o, i: (jnp.minimum(o * n_inner + i, n_blocks - 1), 0)

    if n_outer == 2:
        dims = (pltpu.CORE_PARALLEL, pltpu.ARBITRARY)   # shard outer axis across v7x TCs
    else:
        dims = (pltpu.ARBITRARY, pltpu.ARBITRARY)

    bytes_per_elem = inputs.dtype.itemsize + targets.dtype.itemsize
    partials = pl.pallas_call(
        kernel,
        out_shape=jax.ShapeDtypeStruct((n_outer, 2, _SUBLANE, _LANE), jnp.float32),
        grid_spec=pltpu.PrefetchScalarGridSpec(
            num_scalar_prefetch=0,
            grid=(n_outer, n_inner),
            in_specs=[
                pl.BlockSpec((eff_tile, _LANE), in_map),
                pl.BlockSpec((eff_tile, _LANE), in_map),
            ],
            out_specs=pl.BlockSpec((1, 2, _SUBLANE, _LANE), lambda o, i: (o, 0, 0, 0)),
            scratch_shapes=[
                pltpu.VMEM((_SUBLANE, _LANE), jnp.float32),  # running sum of BCE
                pltpu.VMEM((_SUBLANE, _LANE), jnp.float32),  # running sum of targets
            ],
        ),
        compiler_params=pltpu.CompilerParams(
            dimension_semantics=dims,
            vmem_limit_bytes=48 * 1024 * 1024,   # 8192-row f32 double-buffered windows on v5e
        ),
        cost_estimate=pl.CostEstimate(
            flops=10 * n_total,
            transcendentals=2 * n_total,
            bytes_accessed=bytes_per_elem * n_total,
        ),
    )(x2, t2)

    # ---- tiny scalar epilogue ------------------------------------------------
    bce_sum = jnp.sum(partials[:, 0])
    t_sum = jnp.sum(partials[:, 1])
    n = jnp.float32(n_total)
    bce_mean = bce_sum / n                                  # scalar BCE (reduction='mean')
    at_mean = alpha + (1.0 - 2.0 * alpha) * (t_sum / n)     # mean of gathered alpha table
    pt = jnp.exp(-bce_mean)
    one_m_pt = 1.0 - pt
    if float(gamma) == 2.0:
        mod = one_m_pt * one_m_pt                           # avoid pow lowering
    else:
        mod = one_m_pt ** gamma
    return at_mean * mod * bce_mean


def reference(inputs, targets, alpha=ALPHA, gamma=GAMMA):
    # Pure-JAX mirror of the PyTorch forward (correctness oracle).
    x = inputs.astype(jnp.float32)
    t = targets.astype(jnp.float32)
    bce = jnp.mean(jnp.maximum(x, 0.0) - x * t + jnp.log1p(jnp.exp(-jnp.abs(x))))
    table = jnp.array([alpha, 1.0 - alpha], jnp.float32)
    at = table[t.reshape(-1).astype(jnp.int32)]
    pt = jnp.exp(-bce)
    return jnp.mean(at * (1.0 - pt) ** gamma * bce)


if __name__ == "__main__":
    key = jax.random.PRNGKey(0)

    def make(shape, salt):
        kx, kt = jax.random.split(jax.random.fold_in(key, salt))
        xx = jax.random.normal(kx, shape, dtype=jnp.float32)
        tt = jax.random.bernoulli(kt, 0.5, shape).astype(jnp.float32)
        return xx, tt

    cases = [
        ((2, 4, 16, 16), {}),                 # demo NCHW shape; single full block
        ((2, 3, 50, 30), {}),                 # ragged size (not /1024): in-kernel tail mask
        ((1, 4, 79, 128), {"row_tile": 256}), # multi-step reduction + masked last block
        ((8, 16, 64, 64), {}),                # larger block exercising the chunked fold
    ]
    for idx, (shape, kw) in enumerate(cases):
        x, t = make(shape, idx)
        # min_kernel_elems=0 forces the Pallas kernel path even at these small sizes.
        loss = weighted_focal_loss(x, t, min_kernel_elems=0, **kw)
        loss = jax.block_until_ready(loss)
        ref = reference(x, t)
        err = abs(float(loss) - float(ref))
        assert err <= 1e-5 + 1e-3 * abs(float(ref)), (shape, float(loss), float(ref))
    print("KERNEL_OK")
</pallas_src>

<mosaic_0001>
module attributes {stable_mosaic.version = 11 : i64} {
  func.func @_focal_partial_kernel(%arg0: i32, %arg1: i32, %arg2: memref<16x128xf32, #tpu.memory_space<vmem>>, %arg3: memref<16x128xf32, #tpu.memory_space<vmem>>, %arg4: memref<1x2x8x128xf32, #tpu.memory_space<vmem>>, %arg5: memref<8x128xf32, #tpu.memory_space<vmem>>, %arg6: memref<8x128xf32, #tpu.memory_space<vmem>>) attributes {dimension_semantics = [#tpu.dimension_semantics<arbitrary>, #tpu.dimension_semantics<arbitrary>], iteration_bounds = array<i64: 1, 1>, scalar_prefetch = 0 : i64, scratch_operands = 2 : i64, tpu.core_type = #tpu.core_type<tc>, window_params = [{transform_indices = @transform_0, window_bounds = array<i64: 16, 128>}, {transform_indices = @transform_1, window_bounds = array<i64: 16, 128>}, {transform_indices = @transform_2, window_bounds = array<i64: 1, 2, 8, 128>}]} {
    %c0_i32 = arith.constant 0 : i32
    %0 = arith.cmpi eq, %arg1, %c0_i32 : i32
    %1 = arith.extui %0 : i1 to i32
    %c0_i32_0 = arith.constant 0 : i32
    %2 = arith.cmpi ne, %1, %c0_i32_0 : i32
    scf.if %2 {
      %cst = arith.constant 0.000000e+00 : f32
      %16 = vector.broadcast %cst : f32 to vector<8x128xf32>
      %c0 = arith.constant 0 : index
      %c0_7 = arith.constant 0 : index
      %17 = vector.load %arg5[%c0, %c0_7] : memref<8x128xf32, #tpu.memory_space<vmem>>, vector<8x128xf32>
      tpu.vector_store %arg5[%c0, %c0_7], %16 {strides = array<i32>} : memref<8x128xf32, #tpu.memory_space<vmem>>, vector<8x128xf32>,
      %cst_8 = arith.constant 0.000000e+00 : f32
      %18 = vector.broadcast %cst_8 : f32 to vector<8x128xf32>
      %c0_9 = arith.constant 0 : index
      %c0_10 = arith.constant 0 : index
      %19 = vector.load %arg6[%c0_9, %c0_10] : memref<8x128xf32, #tpu.memory_space<vmem>>, vector<8x128xf32>
      tpu.vector_store %arg6[%c0_9, %c0_10], %18 {strides = array<i32>} : memref<8x128xf32, #tpu.memory_space<vmem>>, vector<8x128xf32>,
    } else {
    }
    %c1_i32 = arith.constant 1 : i32
    %3 = arith.muli %arg0, %c1_i32 : i32
    %4 = arith.addi %3, %arg1 : i32
    %c2048_i32 = arith.constant 2048 : i32
    %5 = arith.muli %4, %c2048_i32 : i32
    %c2048_i32_1 = arith.constant 2048 : i32
    %6 = arith.addi %5, %c2048_i32_1 : i32
    %c2048_i32_2 = arith.constant 2048 : i32
    %7 = arith.cmpi sle, %6, %c2048_i32_2 : i32
    %8 = arith.extui %7 : i1 to i32
    %c0_i32_3 = arith.constant 0 : i32
    %9 = arith.cmpi ne, %8, %c0_i32_3 : i32
    scf.if %9 {
      %c0 = arith.constant 0 : index
      %c0_7 = arith.constant 0 : index
      %16 = vector.load %arg2[%c0, %c0_7] : memref<16x128xf32, #tpu.memory_space<vmem>>, vector<16x128xf32>
      %c0_8 = arith.constant 0 : index
      %c0_9 = arith.constant 0 : index
      %17 = vector.load %arg3[%c0_8, %c0_9] : memref<16x128xf32, #tpu.memory_space<vmem>>, vector<16x128xf32>
      %c0_10 = arith.constant 0 : index
      %c0_11 = arith.constant 0 : index
      %18 = vector.load %arg5[%c0_10, %c0_11] : memref<8x128xf32, #tpu.memory_space<vmem>>, vector<8x128xf32>
      %cst = arith.constant 0.000000e+00 : f32
      %19 = vector.broadcast %cst : f32 to vector<16x128xf32>
      %20 = arith.maximumf %16, %19 : vector<16x128xf32>
      %21 = arith.mulf %16, %17 : vector<16x128xf32>
      %22 = arith.subf %20, %21 : vector<16x128xf32>
      %23 = math.absf %16 : vector<16x128xf32>
      %cst_12 = arith.constant 0.000000e+00 : f32
      %24 = vector.broadcast %cst_12 : f32 to vector<16x128xf32>
      %25 = arith.subf %24, %23 : vector<16x128xf32>
      %26 = math.exp %25 : vector<16x128xf32>
      %27 = math.log1p %26 : vector<16x128xf32>
      %28 = arith.addf %22, %27 : vector<16x128xf32>
      %29 = vector.shape_cast %28 : vector<16x128xf32> to vector<2x8x128xf32>
      %cst_13 = arith.constant dense<0.000000e+00> : vector<8x128xf32>
      %30 = vector.multi_reduction <add>, %29, %cst_13 [0] : vector<2x8x128xf32> to vector<8x128xf32>
      %31 = arith.addf %18, %30 : vector<8x128xf32>
      %c0_14 = arith.constant 0 : index
      %c0_15 = arith.constant 0 : index
      %32 = vector.load %arg5[%c0_14, %c0_15] : memref<8x128xf32, #tpu.memory_space<vmem>>, vector<8x128xf32>
      tpu.vector_store %arg5[%c0_14, %c0_15], %31 {strides = array<i32>} : memref<8x128xf32, #tpu.memory_space<vmem>>, vector<8x128xf32>,
      %c0_16 = arith.constant 0 : index
      %c0_17 = arith.constant 0 : index
      %33 = vector.load %arg6[%c0_16, %c0_17] : memref<8x128xf32, #tpu.memory_space<vmem>>, vector<8x128xf32>
      %34 = vector.shape_cast %17 : vector<16x128xf32> to vector<2x8x128xf32>
      %cst_18 = arith.constant dense<0.000000e+00> : vector<8x128xf32>
      %35 = vector.multi_reduction <add>, %34, %cst_18 [0] : vector<2x8x128xf32> to vector<8x128xf32>
      %36 = arith.addf %33, %35 : vector<8x128xf32>
      %c0_19 = arith.constant 0 : index
      %c0_20 = arith.constant 0 : index
      %37 = vector.load %arg6[%c0_19, %c0_20] : memref<8x128xf32, #tpu.memory_space<vmem>>, vector<8x128xf32>
      tpu.vector_store %arg6[%c0_19, %c0_20], %36 {strides = array<i32>} : memref<8x128xf32, #tpu.memory_space<vmem>>, vector<8x128xf32>,
    } else {
    }
    %true = arith.constant true
    %10 = arith.xori %7, %true : i1
    %11 = arith.extui %10 : i1 to i32
    %c0_i32_4 = arith.constant 0 : i32
    %12 = arith.cmpi ne, %11, %c0_i32_4 : i32
    scf.if %12 {
      %16 = tpu.iota {dimensions = array<i32: 0>} : vector<16x128xi32>
      %17 = tpu.iota {dimensions = array<i32: 1>} : vector<16x128xi32>
      %c128_i32 = arith.constant 128 : i32
      %18 = vector.broadcast %c128_i32 : i32 to vector<16x128xi32>
      %19 = arith.muli %16, %18 : vector<16x128xi32>
      %20 = arith.addi %19, %17 : vector<16x128xi32>
      %c0 = arith.constant 0 : index
      %c0_7 = arith.constant 0 : index
      %21 = vector.load %arg2[%c0, %c0_7] : memref<16x128xf32, #tpu.memory_space<vmem>>, vector<16x128xf32>
      %c0_8 = arith.constant 0 : index
      %c0_9 = arith.constant 0 : index
      %22 = vector.load %arg3[%c0_8, %c0_9] : memref<16x128xf32, #tpu.memory_space<vmem>>, vector<16x128xf32>
      %c0_i32_10 = arith.constant 0 : i32
      %23 = arith.addi %5, %c0_i32_10 : i32
      %24 = vector.broadcast %23 : i32 to vector<16x128xi32>
      %25 = arith.addi %24, %20 : vector<16x128xi32>
      %c2048_i32_11 = arith.constant 2048 : i32
      %26 = vector.broadcast %c2048_i32_11 : i32 to vector<16x128xi32>
      %27 = arith.cmpi slt, %25, %26 : vector<16x128xi32>
      %c0_12 = arith.constant 0 : index
      %c0_13 = arith.constant 0 : index
      %28 = vector.load %arg5[%c0_12, %c0_13] : memref<8x128xf32, #tpu.memory_space<vmem>>, vector<8x128xf32>
      %cst = arith.constant 0.000000e+00 : f32
      %29 = vector.broadcast %cst : f32 to vector<16x128xf32>
      %30 = arith.maximumf %21, %29 : vector<16x128xf32>
      %31 = arith.mulf %21, %22 : vector<16x128xf32>
      %32 = arith.subf %30, %31 : vector<16x128xf32>
      %33 = math.absf %21 : vector<16x128xf32>
      %cst_14 = arith.constant 0.000000e+00 : f32
      %34 = vector.broadcast %cst_14 : f32 to vector<16x128xf32>
      %35 = arith.subf %34, %33 : vector<16x128xf32>
      %36 = math.exp %35 : vector<16x128xf32>
      %37 = math.log1p %36 : vector<16x128xf32>
      %38 = arith.addf %32, %37 : vector<16x128xf32>
      %cst_15 = arith.constant 0.000000e+00 : f32
      %39 = vector.broadcast %cst_15 : f32 to vector<16x128xf32>
      %40 = arith.select %27, %38, %39 : vector<16x128xi1>, vector<16x128xf32>
      %41 = vector.shape_cast %40 : vector<16x128xf32> to vector<2x8x128xf32>
      %cst_16 = arith.constant dense<0.000000e+00> : vector<8x128xf32>
      %42 = vector.multi_reduction <add>, %41, %cst_16 [0] : vector<2x8x128xf32> to vector<8x128xf32>
      %43 = arith.addf %28, %42 : vector<8x128xf32>
      %c0_17 = arith.constant 0 : index
      %c0_18 = arith.constant 0 : index
      %44 = vector.load %arg5[%c0_17, %c0_18] : memref<8x128xf32, #tpu.memory_space<vmem>>, vector<8x128xf32>
      tpu.vector_store %arg5[%c0_17, %c0_18], %43 {strides = array<i32>} : memref<8x128xf32, #tpu.memory_space<vmem>>, vector<8x128xf32>,
      %c0_19 = arith.constant 0 : index
      %c0_20 = arith.constant 0 : index
      %45 = vector.load %arg6[%c0_19, %c0_20] : memref<8x128xf32, #tpu.memory_space<vmem>>, vector<8x128xf32>
      %cst_21 = arith.constant 0.000000e+00 : f32
      %46 = vector.broadcast %cst_21 : f32 to vector<16x128xf32>
      %47 = arith.select %27, %22, %46 : vector<16x128xi1>, vector<16x128xf32>
      %48 = vector.shape_cast %47 : vector<16x128xf32> to vector<2x8x128xf32>
      %cst_22 = arith.constant dense<0.000000e+00> : vector<8x128xf32>
      %49 = vector.multi_reduction <add>, %48, %cst_22 [0] : vector<2x8x128xf32> to vector<8x128xf32>
      %50 = arith.addf %45, %49 : vector<8x128xf32>
      %c0_23 = arith.constant 0 : index
      %c0_24 = arith.constant 0 : index
      %51 = vector.load %arg6[%c0_23, %c0_24] : memref<8x128xf32, #tpu.memory_space<vmem>>, vector<8x128xf32>
      tpu.vector_store %arg6[%c0_23, %c0_24], %50 {strides = array<i32>} : memref<8x128xf32, #tpu.memory_space<vmem>>, vector<8x128xf32>,
    } else {
    }
    %c0_i32_5 = arith.constant 0 : i32
    %13 = arith.cmpi eq, %arg1, %c0_i32_5 : i32
    %14 = arith.extui %13 : i1 to i32
    %c0_i32_6 = arith.constant 0 : i32
    %15 = arith.cmpi ne, %14, %c0_i32_6 : i32
    scf.if %15 {
      %c0 = arith.constant 0 : index
      %c0_7 = arith.constant 0 : index
      %16 = vector.load %arg5[%c0, %c0_7] : memref<8x128xf32, #tpu.memory_space<vmem>>, vector<8x128xf32>
      %c0_8 = arith.constant 0 : index
      %c0_9 = arith.constant 0 : index
      %c0_10 = arith.constant 0 : index
      %c0_11 = arith.constant 0 : index
      %17 = vector.load %arg4[%c0_8, %c0_9, %c0_10, %c0_11] : memref<1x2x8x128xf32, #tpu.memory_space<vmem>>, vector<1x1x8x128xf32>
      %18 = vector.shape_cast %17 : vector<1x1x8x128xf32> to vector<8x128xf32>
      %19 = vector.shape_cast %16 : vector<8x128xf32> to vector<1x1x8x128xf32>
      tpu.vector_store %arg4[%c0_8, %c0_9, %c0_10, %c0_11], %19 {strides = array<i32>} : memref<1x2x8x128xf32, #tpu.memory_space<vmem>>, vector<1x1x8x128xf32>,
      %c0_12 = arith.constant 0 : index
      %c0_13 = arith.constant 0 : index
      %20 = vector.load %arg6[%c0_12, %c0_13] : memref<8x128xf32, #tpu.memory_space<vmem>>, vector<8x128xf32>
      %c0_14 = arith.constant 0 : index
      %c1 = arith.constant 1 : index
      %c0_15 = arith.constant 0 : index
      %c0_16 = arith.constant 0 : index
      %21 = vector.load %arg4[%c0_14, %c1, %c0_15, %c0_16] : memref<1x2x8x128xf32, #tpu.memory_space<vmem>>, vector<1x1x8x128xf32>
      %22 = vector.shape_cast %21 : vector<1x1x8x128xf32> to vector<8x128xf32>
      %23 = vector.shape_cast %20 : vector<8x128xf32> to vector<1x1x8x128xf32>
      tpu.vector_store %arg4[%c0_14, %c1, %c0_15, %c0_16], %23 {strides = array<i32>} : memref<1x2x8x128xf32, #tpu.memory_space<vmem>>, vector<1x1x8x128xf32>,
    } else {
    }
    return
  }
  func.func @transform_0(%arg0: i32, %arg1: i32) -> (i32, i32) {
    %c1_i32 = arith.constant 1 : i32
    %0 = arith.muli %arg0, %c1_i32 : i32
    %1 = arith.addi %0, %arg1 : i32
    %c0_i32 = arith.constant 0 : i32
    %c0_i32_0 = arith.constant 0 : i32
    return %1, %c0_i32 : i32, i32
  }
  func.func @transform_1(%arg0: i32, %arg1: i32) -> (i32, i32) {
    %c1_i32 = arith.constant 1 : i32
    %0 = arith.muli %arg0, %c1_i32 : i32
    %1 = arith.addi %0, %arg1 : i32
    %c0_i32 = arith.constant 0 : i32
    %c0_i32_0 = arith.constant 0 : i32
    return %1, %c0_i32 : i32, i32
  }
  func.func @transform_2(%arg0: i32, %arg1: i32) -> (i32, i32, i32, i32) {
    %c0_i32 = arith.constant 0 : i32
    %c0_i32_0 = arith.constant 0 : i32
    %c0_i32_1 = arith.constant 0 : i32
    %c0_i32_2 = arith.constant 0 : i32
    return %arg0, %c0_i32, %c0_i32_0, %c0_i32_1 : i32, i32, i32, i32
  }
}

</mosaic_0001>

<llo_original>
// kernel: tpu_custom_call.1
$region0: #{tpu_custom_call.1}
  #allocation0 [shape = 'u32[]', space=smem, size = 0x4, offset = 0x4, fixed_abs, tag = 'smem constant byte address 0x4 - core index']
  #allocation1 [shape = 'u32[144,128]{1,0:T(1,128)}', space=vmem, size = 0x12000, scoped, tag = 'internal scratch']
  #allocation2 [shape = 'f32[8,128]{1,0:T(8,128)}', space=vmem, size = 0x1000, scoped, tag = 'scratch operand']
  #allocation3 [shape = 'f32[8,128]{1,0:T(8,128)}', space=vmem, size = 0x1000, scoped, tag = 'scratch operand']
  %s0 = inlined_call_operand.hbm [shape: f32[16,128], index: 0, kind: input, shape index: {}]
  %s1 = inlined_call_operand.hbm [shape: f32[16,128], index: 1, kind: input, shape index: {}]
  %s2 = inlined_call_operand.hbm [shape: f32[1,2,8,128], index: 2, kind: output, shape index: {}]
  %s3 = sld [smem:[#allocation0]]
  $region42: #{tpu_custom_call.1} parent=0
    _
  %s5 = ssub.s32 1, %s3
  %s6 = scalar_select 0, %s5, %s3
  $region1: #{tpu_custom_call.1} parent=0
    #allocation4 [shape = 'u8[8192]{0}', space=vmem, size = 0x2000, scoped, tag = 'input window, operand 0, single buffered']
    #allocation5 [shape = 's32[1]{0}', space=sflag, size = 0x4, scoped, tag = 'scoped memory for tpu_custom_call.1']
    #allocation6 [shape = 's32[1]{0}', space=sflag, size = 0x4, scoped, tag = 'scoped memory for tpu_custom_call.1']
    #allocation7 [shape = 'u8[8192]{0}', space=vmem, size = 0x2000, scoped, tag = 'input window, operand 1, single buffered']
    #allocation8 [shape = 's32[1]{0}', space=sflag, size = 0x4, scoped, tag = 'scoped memory for tpu_custom_call.1']
    #allocation9 [shape = 'u8[8192]{0}', space=vmem, size = 0x2000, scoped, tag = 'output window, operand 0, single buffered']
    %7 = vsyncpa [#allocation5], 0
    %8 = vsyncpa [#allocation8], 0
    %9 = vsyncpa [#allocation6], 0
    // Predicated region
    $region2: #{tpu_custom_call.1} parent=1 // pred_check
      _
    $region3: #{tpu_custom_call.1} parent=1 // pred_check_branch
      %11 = sbr.rel (0) target = $region5
    $region4: #{tpu_custom_call.1} parent=1 // pred_region
      %s12 = sadd.s32 0, 0
      %s13 = smul.u32 2, %s12
      %s15 = ssub.s32 256, 256
      %16 = vsyncadd [#allocation5], %s15
      %s17 = smul.addr %s13, 128
      %s18 = scalar_lea.hbm %s0, %s17
      %s19 = sshll.u32 [#allocation4], 4
      %s20 = int_to_ptr.vmem [resolvable:$true] %s19
      %25 = dma.hbm_to_vmem [thread:$0]  %s18, 256, %s20, [#allocation5], 128, 128, 8
    $region5: #{tpu_custom_call.1} parent=1 // pred_fallthru
      _
    // Predicated region
    $region6: #{tpu_custom_call.1} parent=1 // pred_check
      _
    $region7: #{tpu_custom_call.1} parent=1 // pred_check_branch
      %27 = sbr.rel (0) target = $region9
    $region8: #{tpu_custom_call.1} parent=1 // pred_region
      %s28 = sadd.s32 0, 0
      %s29 = smul.u32 2, %s28
      %s31 = ssub.s32 256, 256
      %32 = vsyncadd [#allocation8], %s31
      %s33 = smul.addr %s29, 128
      %s34 = scalar_lea.hbm %s1, %s33
      %s35 = sshll.u32 [#allocation7], 4
      %s36 = int_to_ptr.vmem [resolvable:$true] %s35
      %41 = dma.hbm_to_vmem [thread:$0]  %s34, 256, %s36, [#allocation8], 128, 128, 8
    $region9: #{tpu_custom_call.1} parent=1 // pred_fallthru
      _
    // Predicated region
    $region10: #{tpu_custom_call.1} parent=1 // pred_check
      _
    $region11: #{tpu_custom_call.1} parent=1 // pred_check_branch
      %43 = sbr.rel (0) target = $region13
    $region12: #{tpu_custom_call.1} parent=1 // pred_region
      %44 = dma.done [#allocation5], 256
    $region13: #{tpu_custom_call.1} parent=1 // pred_fallthru
      _
    // Predicated region
    $region14: #{tpu_custom_call.1} parent=1 // pred_check
      _
    $region15: #{tpu_custom_call.1} parent=1 // pred_check_branch
      %46 = sbr.rel (0) target = $region17
    $region16: #{tpu_custom_call.1} parent=1 // pred_region
      %47 = dma.done [#allocation8], 256
    $region17: #{tpu_custom_call.1} parent=1 // pred_fallthru
      _
    %s48 = sadd.s32 0, 0
    %s49 = smul.u32 2, %s48
    %s50 = sadd.s32 0, 0
    %s51 = smul.u32 2, %s50
    %p52 = scmp.eq.s32.totalorder 0, 0
    // Predicated region
    $region18: #{tpu_custom_call.1} parent=1 // pred_check
      %p53 = pneg %p52
    $region19: #{tpu_custom_call.1} parent=1 // pred_check_branch
      %55 = sbr.rel (%p53) target = $region21
    $region20: #{tpu_custom_call.1} parent=1 // pred_region
      %56 = vst [vmem:[#allocation2] sm:$0xff] 0.0
      %57 = vst [vmem:[#allocation3] sm:$0xff] 0.0
    $region21: #{tpu_custom_call.1} parent=1 // pred_fallthru
      _
    %s58 = sadd.s32 0, 0
    %s59 = smul.u32 %s58, 2048
    %s60 = sadd.s32 %s59, 2048
    %p61 = scmp.le.s32.totalorder %s60, 2048
    // Predicated region
    $region22: #{tpu_custom_call.1} parent=1 // pred_check
      %p62 = pneg %p61
    $region23: #{tpu_custom_call.1} parent=1 // pred_check_branch
      %64 = sbr.rel (%p62) target = $region25
    $region24: #{tpu_custom_call.1} parent=1 // pred_region
      %v65 = vld [vmem:[#allocation4] sm:$0xff]
      %v66 = vld [vmem:[#allocation4 + $0x8] sm:$0xff]
      %v67 = vld [vmem:[#allocation7] sm:$0xff]
      %v68 = vld [vmem:[#allocation7 + $0x8] sm:$0xff]
      %v69 = vld [vmem:[#allocation2] sm:$0xff]
      %v70 = vmax.f32 %v65, 0.0
      %v71 = vmax.f32 %v66, 0.0
      %v72 = vmul.f32 %v65, %v67
      %v73 = vmul.f32 %v66, %v68
      %v74 = vsub.f32 %v70, %v72
      %v75 = vsub.f32 %v71, %v73
      %v76 = vand.u32 2147483647, %v65
      %v77 = vand.u32 2147483647, %v66
      %v78 = vsub.f32 0.0, %v76
      %v79 = vsub.f32 0.0, %v77
      %v80 = vmul.f32 %v78, 1.442695
      %v81 = vpow.pop %v80
      %v82 = vmul.f32 %v79, 1.442695
      %v83 = vpow.pop %v82
      %v84 = vadd.f32 %v81, 1.0
      %v85 = vlog2.pop %v84
      %v86 = vmul.f32 %v85, 0.6931472
      %v87 = vmul.f32 -0.5, %v81
      %v88 = vadd.f32 %v87, 1.0
      %v89 = vmul.f32 %v88, %v81
      %v90 = vand.u32 2147483647, %v81
      %vm91 = vcmp.lt.f32.partialorder %v90, 0.0004427343
      %v92 = vsel %vm91, %v89, %v86
      %v93 = vadd.f32 %v83, 1.0
      %v94 = vlog2.pop %v93
      %v95 = vmul.f32 %v94, 0.6931472
      %v96 = vmul.f32 -0.5, %v83
      %v97 = vadd.f32 %v96, 1.0
      %v98 = vmul.f32 %v97, %v83
      %v99 = vand.u32 2147483647, %v83
      %vm100 = vcmp.lt.f32.partialorder %v99, 0.0004427343
      %v101 = vsel %vm100, %v98, %v95
      %v102 = vadd.f32 %v74, %v92
      %v103 = vadd.f32 %v75, %v101
      %v104 = vadd.f32 %v102, %v103
      %v105 = vadd.f32 %v69, %v104
      %106 = vst [vmem:[#allocation2] sm:$0xff] %v105
      %v107 = vld [vmem:[#allocation3] sm:$0xff]
      %v108 = vadd.f32 %v67, %v68
      %v109 = vadd.f32 %v107, %v108
      %110 = vst [vmem:[#allocation3] sm:$0xff] %v109
    $region25: #{tpu_custom_call.1} parent=1 // pred_fallthru
      _
    %p111 = scmp.gt.s32.totalorder %s60, 2048
    // Predicated region
    $region26: #{tpu_custom_call.1} parent=1 // pred_check
      %p112 = pneg %p111
    $region27: #{tpu_custom_call.1} parent=1 // pred_check_branch
      %114 = sbr.rel (%p112) target = $region29
    $region28: #{tpu_custom_call.1} parent=1 // pred_region
      %v115 = vlaneseq
      %v116 = vshrl.u32 %v115, 7
      %v117 = vadd.s32 %v116, 8
      %v118 = vlaneseq
      %v119 = vand.u32 %v118, 127
      %v120 = vmul.u32 %v116, 128
      %v121 = vmul.u32 %v117, 128
      %v122 = vadd.s32 %v120, %v119
      %v123 = vadd.s32 %v121, %v119
      %v124 = vld [vmem:[#allocation4] sm:$0xff]
      %v125 = vld [vmem:[#allocation4 + $0x8] sm:$0xff]
      %v126 = vld [vmem:[#allocation7] sm:$0xff]
      %v127 = vld [vmem:[#allocation7 + $0x8] sm:$0xff]
      %v128 = vstv %s59
      %v129 = vadd.s32 %v128, %v122
      %v130 = vadd.s32 %v128, %v123
      %vm131 = vcmp.lt.s32.totalorder %v129, 2048
      %vm132 = vcmp.lt.s32.totalorder %v130, 2048
      %v133 = vld [vmem:[#allocation2] sm:$0xff]
      %v134 = vmax.f32 %v124, 0.0
      %v135 = vmax.f32 %v125, 0.0
      %v136 = vmul.f32 %v124, %v126
      %v137 = vmul.f32 %v125, %v127
      %v138 = vsub.f32 %v134, %v136
      %v139 = vsub.f32 %v135, %v137
      %v140 = vand.u32 2147483647, %v124
      %v141 = vand.u32 2147483647, %v125
      %v142 = vsub.f32 0.0, %v140
      %v143 = vsub.f32 0.0, %v141
      %v144 = vmul.f32 %v142, 1.442695
      %v145 = vpow.pop %v144
      %v146 = vmul.f32 %v143, 1.442695
      %v147 = vpow.pop %v146
      %v148 = vadd.f32 %v145, 1.0
      %v149 = vlog2.pop %v148
      %v150 = vmul.f32 %v149, 0.6931472
      %v151 = vmul.f32 -0.5, %v145
      %v152 = vadd.f32 %v151, 1.0
      %v153 = vmul.f32 %v152, %v145
      %v154 = vand.u32 2147483647, %v145
      %vm155 = vcmp.lt.f32.partialorder %v154, 0.0004427343
      %v156 = vsel %vm155, %v153, %v150
      %v157 = vadd.f32 %v147, 1.0
      %v158 = vlog2.pop %v157
      %v159 = vmul.f32 %v158, 0.6931472
      %v160 = vmul.f32 -0.5, %v147
      %v161 = vadd.f32 %v160, 1.0
      %v162 = vmul.f32 %v161, %v147
      %v163 = vand.u32 2147483647, %v147
      %vm164 = vcmp.lt.f32.partialorder %v163, 0.0004427343
      %v165 = vsel %vm164, %v162, %v159
      %v166 = vadd.f32 %v138, %v156
      %v167 = vadd.f32 %v139, %v165
      %v168 = vsel %vm131, %v166, 0.0
      %v169 = vsel %vm132, %v167, 0.0
      %v170 = vadd.f32 %v168, %v169
      %v171 = vadd.f32 %v133, %v170
      %172 = vst [vmem:[#allocation2] sm:$0xff] %v171
      %v173 = vld [vmem:[#allocation3] sm:$0xff]
      %v174 = vsel %vm131, %v126, 0.0
      %v175 = vsel %vm132, %v127, 0.0
      %v176 = vadd.f32 %v174, %v175
      %v177 = vadd.f32 %v173, %v176
      %178 = vst [vmem:[#allocation3] sm:$0xff] %v177
    $region29: #{tpu_custom_call.1} parent=1 // pred_fallthru
      _
    // Predicated region
    $region30: #{tpu_custom_call.1} parent=1 // pred_check
      %p179 = pneg %p52
    $region31: #{tpu_custom_call.1} parent=1 // pred_check_branch
      %181 = sbr.rel (%p179) target = $region33
    $region32: #{tpu_custom_call.1} parent=1 // pred_region
      %v182 = vld [vmem:[#allocation2] sm:$0xff]
      %183 = vst [vmem:[#allocation9] sm:$0xff] %v182
      %v184 = vld [vmem:[#allocation3] sm:$0xff]
      %s185 = scalar_lea.vmem [#allocation9], 8
      %186 = vst [vmem:[%s185] sm:$0xff] %v184
    $region33: #{tpu_custom_call.1} parent=1 // pred_fallthru
      _
    // Predicated region
    $region34: #{tpu_custom_call.1} parent=1 // pred_check
      _
    $region35: #{tpu_custom_call.1} parent=1 // pred_check_branch
      %188 = sbr.rel (0) target = $region37
    $region36: #{tpu_custom_call.1} parent=1 // pred_region
      %s190 = ssub.s32 256, 256
      %191 = vsyncadd [#allocation6], %s190
      %s192 = sshll.u32 [#allocation9], 4
      %s193 = int_to_ptr.vmem [resolvable:$true] %s192
      %198 = dma.vmem_to_hbm [thread:$0]  %s193, 256, %s2, [#allocation6], 128, 128, 8
    $region37: #{tpu_custom_call.1} parent=1 // pred_fallthru
      _
    // Predicated region
    $region38: #{tpu_custom_call.1} parent=1 // pred_check
      _
    $region39: #{tpu_custom_call.1} parent=1 // pred_check_branch
      %200 = sbr.rel (0) target = $region41
    $region40: #{tpu_custom_call.1} parent=1 // pred_region
      %201 = dma.done [#allocation6], 256
    $region41: #{tpu_custom_call.1} parent=1 // pred_fallthru
      _
    %202 = vsyncpa [#allocation5], 1
    %203 = vsyncpa [#allocation8], 1
    %204 = vsyncpa [#allocation6], 1

</llo_original>
